<compile_context>
chip_gen: v7x
topology: tpu7x:2x2x1
jax: 0.10.0
libtpu: 0.0.40
codegen_flags: <defaults>
</compile_context>

<pallas_src>
import functools

import jax
import jax.numpy as jnp
from jax import lax
from jax.experimental import pallas as pl
from jax.experimental.pallas import tpu as pltpu


def _proj_matrix_kernel(x_ref, seg_ref, w1t_ref, b1_ref, w2_ref, b2_ref,
                        w3_ref, b3_ref, out_ref, acc_ref, *,
                        hw_total, t_hw, rem, inv_hw, needs_mask):
    """Streaming global-average-pool + 3-layer MLP.

    Grid = (batch row-blocks [parallel], spatial tiles [arbitrary]).  Each
    spatial step adds a (rows, t_hw) tile of x into a lane-dense (rows, 128)
    f32 accumulator; the tiny MLP runs only on the final spatial step.
    """
    s = pl.program_id(1)
    rows = x_ref.shape[0]
    n_chunks = t_hw // 128

    @pl.when(s == 0)
    def _init():
        acc_ref[...] = jnp.zeros_like(acc_ref)

    if needs_mask:
        # Valid lanes in this tile (== rem on the last tile, >= t_hw otherwise).
        valid = hw_total - s * t_hw
        lane = lax.broadcasted_iota(jnp.int32, (rows, 128), 1)

    # Lane-dense accumulation: fold the tile into 128-lane chunks with pure
    # VPU adds; only chunks that can straddle the HW boundary get a runtime
    # mask (static decision via `rem`).
    part = None
    for j in range(n_chunks):
        c = x_ref[:, j * 128:(j + 1) * 128]
        if needs_mask and (j + 1) * 128 > rem:
            c = jnp.where(lane + j * 128 < valid, c, 0.0)
        part = c if part is None else part + c
    acc_ref[...] += part

    @pl.when(s == pl.num_programs(1) - 1)
    def _finalize():
        # Single cross-lane reduce + mean scale, once per row-block.
        pooled = jnp.sum(acc_ref[...], axis=-1, keepdims=True) * inv_hw  # (rows,1)

        # fc1 via a bounded per-row-block segment-sum matmul:
        #   h1[b_local, :] = sum_c pooled[b_local*C + c] * w1[c, :]
        # w1t is w1 tiled rb times along rows; seg is the (rb, rb*C) 0/1
        # segment mask.  Avoids a (rows,1)->(rb,C) cross sublane/lane reshape.
        h1 = jnp.dot(seg_ref[...], pooled * w1t_ref[...],
                     preferred_element_type=jnp.float32) + b1_ref[...]
        h1 = jnp.maximum(h1, 0.0)

        h2 = jnp.dot(h1, w2_ref[...],
                     preferred_element_type=jnp.float32) + b2_ref[...]
        h2 = jnp.maximum(h2, 0.0)

        h3 = jnp.dot(h2, w3_ref[...],
                     preferred_element_type=jnp.float32) + b3_ref[...]
        out_ref[...] = h3.astype(out_ref.dtype)


def _round_up(v, m):
    return ((v + m - 1) // m) * m


def _vmem_limit_bytes():
    """Generation-aware scoped-VMEM limit: ~75% of physical VMEM, capped at
    96 MiB (v5e/v6e: 128 MiB physical -> 96 MiB; v7x: 64 MiB -> 48 MiB),
    never below the 16 MiB v5e scoped default."""
    cap = 64 * 1024 * 1024
    try:
        cap = int(pltpu.get_tpu_info().vmem_capacity_bytes)
    except Exception:
        pass
    return max(16 * 1024 * 1024, min((cap * 3) // 4, 96 * 1024 * 1024))


def _choose_batch_block(batch, channels, *, max_rows=1024):
    """Batches per row-block.  Must be a multiple of 8 (sublane rule on the
    (rb, tt_pad) out block / (rb*C, t_hw) x block) unless it equals B.  Aims
    for >= 2 blocks when B > 8 so v7x's two TensorCores both get work, and
    caps rows-per-block so w1t / seg / acc stay small (bounded fc1 matmul)."""
    if batch <= 8:
        return batch
    rb = -(-batch // 2)              # ~half the batch -> two row-blocks
    rb = -(-rb // 8) * 8             # round up to a multiple of 8
    cap = max(8, (max_rows // max(channels, 1)) // 8 * 8)
    rb = max(8, min(rb, cap))
    return min(rb, batch)


def _choose_spatial_tile(rows, hw, vmem_limit, fixed_bytes):
    """Largest multiple-of-128 spatial tile whose double-buffered f32
    (rows, t_hw) x tile fits in (limit - fixed footprint - headroom).  Capped
    so the unrolled per-chunk add loop stays short; never shrunk because of
    large B*C (the row axis is tiled instead)."""
    t_full = _round_up(hw, 128)
    budget = max(vmem_limit - fixed_bytes - 2 * 1024 * 1024, 2 * 1024 * 1024)
    t = (budget // (2 * rows * 4)) // 128 * 128
    return max(128, min(t, t_full, 16384))


def projection_matrix_network(x, params, target_channels, *,
                              batch_block=None, spatial_tile=None):
    """x: (B, C, H, W) float32.  Returns (B, target_channels, target_channels)."""
    B, C, H, W = x.shape
    HW = H * W
    BC = B * C
    w1, b1, w2, b2, w3, b3 = params
    tt = target_channels * target_channels

    # Lane-dense output: pad fc3 so the output last dim is a multiple of 128.
    tt_pad = _round_up(tt, 128)
    if tt_pad != tt:
        w3 = jnp.pad(w3, ((0, 0), (0, tt_pad - tt)))
        b3 = jnp.pad(b3, ((0, 0), (0, tt_pad - tt)))

    # (B*C, HW): dense sublane packing.  NO host-side spatial pad — the tail
    # of the last spatial tile is masked in-kernel instead (saves a full extra
    # HBM read+write of x whenever HW % t_hw != 0).
    x2d = x.reshape(BC, HW)

    # Row-block (batches per parallel grid step).
    rb = batch_block if batch_block is not None else _choose_batch_block(B, C)
    rb = min(max(int(rb), 1), B)
    if rb != B and rb % 8 != 0:
        rb = min(max(8, (rb // 8) * 8), B)
    rows = rb * C

    # Generation-aware VMEM limit and spatial tile budget.  The fixed
    # footprint counts the (default double-buffered) resident weight/bias/seg
    # blocks, the out block, and the acc scratch.
    vmem_limit = _vmem_limit_bytes()
    fixed = 4 * (2 * rows * 128 + 2 * 128 + 2 * 128 * 256 + 2 * 256
                 + 2 * 256 * tt_pad + 2 * tt_pad + 2 * rb * rows
                 + 2 * rb * tt_pad + rows * 128)
    t_hw = (spatial_tile if spatial_tile is not None
            else _choose_spatial_tile(rows, HW, vmem_limit, fixed))
    assert t_hw % 128 == 0, "spatial_tile must be a multiple of 128"

    n_rows = -(-B // rb)
    n_spatial = -(-HW // t_hw)
    rem = HW - (n_spatial - 1) * t_hw          # valid lanes in the last tile
    needs_mask = (HW % t_hw) != 0

    # fc1 weight tiled rb times + per-row-block segment mask (bounded: rb is
    # capped), so fc1 runs off the flat (rows, 1) pooled sums in-kernel.
    w1t = jnp.tile(w1, (rb, 1))                                      # (rows, 128)
    seg = (jnp.arange(rb)[:, None] ==
           (jnp.arange(rows)[None, :] // C)).astype(jnp.float32)     # (rb, rows)

    kernel = functools.partial(_proj_matrix_kernel, hw_total=HW, t_hw=t_hw,
                               rem=rem, inv_hw=1.0 / float(HW),
                               needs_mask=needs_mask)

    def const(shape):
        return pl.BlockSpec(shape, lambda r, s: (0, 0))

    flops = BC * HW + 2 * B * (C * 128 + 128 * 256 + 256 * tt_pad)
    bytes_accessed = 4 * (BC * HW + rows * 128 + 128 + 128 * 256 + 256
                          + 256 * tt_pad + tt_pad + rb * rows + B * tt_pad)

    out = pl.pallas_call(
        kernel,
        out_shape=jax.ShapeDtypeStruct((B, tt_pad), jnp.float32),
        grid_spec=pltpu.PrefetchScalarGridSpec(
            num_scalar_prefetch=0,
            grid=(n_rows, n_spatial),
            in_specs=[
                pl.BlockSpec((rows, t_hw), lambda r, s: (r, s)),   # streamed x
                const((rb, rows)),       # seg mask
                const((rows, 128)),      # w1 tiled rb times
                const((1, 128)),         # b1
                const((128, 256)),       # w2
                const((1, 256)),         # b2
                const((256, tt_pad)),    # w3 (lane-padded)
                const((1, tt_pad)),      # b3 (lane-padded)
            ],
            out_specs=pl.BlockSpec((rb, tt_pad), lambda r, s: (r, 0)),
            scratch_shapes=[pltpu.VMEM((rows, 128), jnp.float32)],
        ),
        compiler_params=pltpu.CompilerParams(
            dimension_semantics=("parallel", "arbitrary"),
            vmem_limit_bytes=int(vmem_limit),
        ),
        cost_estimate=pl.CostEstimate(flops=int(flops), transcendentals=0,
                                      bytes_accessed=int(bytes_accessed)),
    )(x2d, seg, w1t, b1, w2, b2, w3, b3)

    return out[:, :tt].reshape(B, target_channels, target_channels)


def init_params(key, channels, target_channels):
    """Deterministic init mimicking nn.Linear (uniform +/- 1/sqrt(fan_in)).
    Weights stored transposed: (in_features, out_features)."""
    dims = [(channels, 128), (128, 256), (256, target_channels * target_channels)]
    params = []
    for (fan_in, fan_out) in dims:
        key, kw, kb = jax.random.split(key, 3)
        bound = 1.0 / jnp.sqrt(jnp.float32(fan_in))
        w = jax.random.uniform(kw, (fan_in, fan_out), jnp.float32, -bound, bound)
        b = jax.random.uniform(kb, (1, fan_out), jnp.float32, -bound, bound)
        params += [w, b]
    return tuple(params)


def reference(x, params):
    """Pure-JAX reference of the PyTorch forward pass."""
    w1, b1, w2, b2, w3, b3 = params
    pooled = jnp.mean(x, axis=(2, 3))                 # AdaptiveAvgPool2d(1) + view
    h1 = jnp.maximum(pooled @ w1 + b1, 0.0)
    h2 = jnp.maximum(h1 @ w2 + b2, 0.0)
    return h2 @ w3 + b3


if __name__ == "__main__":
    channels, target_channels = 4, 8
    key = jax.random.PRNGKey(0)
    key, kp = jax.random.split(key)
    params = init_params(kp, channels, target_channels)

    # Config 1 (module's canonical small shape): spatial_tile=128 forces 2
    # streamed spatial steps (exercises accumulate + pl.when finalize).
    B, H, W = 2, 4, 4 * 4  # placeholder, replaced below
    B, H, W = 2, 16, 16
    key, kx = jax.random.split(key)
    x = jax.random.normal(kx, (B, channels, H, W), jnp.float32)
    out = jax.block_until_ready(
        projection_matrix_network(x, params, target_channels, spatial_tile=128))
    ref = reference(x, params).reshape(B, target_channels, target_channels)
    assert out.shape == (B, target_channels, target_channels)
    assert jnp.allclose(out, ref, atol=1e-4, rtol=1e-4), "mismatch vs reference (cfg 1)"

    # Config 2: batch-parallel row blocks (B=16 -> 2 blocks of 8) and a
    # non-multiple-of-128 spatial extent (HW=100) to exercise the in-kernel
    # tail mask that replaced the host-side pad.
    B2, H2, W2 = 16, 10, 10
    key, kx2 = jax.random.split(key)
    x2 = jax.random.normal(kx2, (B2, channels, H2, W2), jnp.float32)
    out2 = jax.block_until_ready(
        projection_matrix_network(x2, params, target_channels))
    ref2 = reference(x2, params).reshape(B2, target_channels, target_channels)
    assert jnp.allclose(out2, ref2, atol=1e-4, rtol=1e-4), "mismatch vs reference (cfg 2)"

    print("KERNEL_OK")
</pallas_src>

<mosaic_0001>
module attributes {stable_mosaic.version = 11 : i64} {
  func.func @_proj_matrix_kernel(%arg0: i32, %arg1: i32, %arg2: memref<8x128xf32, #tpu.memory_space<vmem>>, %arg3: memref<2x8xf32, #tpu.memory_space<vmem>>, %arg4: memref<8x128xf32, #tpu.memory_space<vmem>>, %arg5: memref<1x128xf32, #tpu.memory_space<vmem>>, %arg6: memref<128x256xf32, #tpu.memory_space<vmem>>, %arg7: memref<1x256xf32, #tpu.memory_space<vmem>>, %arg8: memref<256x128xf32, #tpu.memory_space<vmem>>, %arg9: memref<1x128xf32, #tpu.memory_space<vmem>>, %arg10: memref<2x128xf32, #tpu.memory_space<vmem>>, %arg11: memref<8x128xf32, #tpu.memory_space<vmem>>) attributes {dimension_semantics = [#tpu.dimension_semantics<parallel>, #tpu.dimension_semantics<arbitrary>], iteration_bounds = array<i64: 1, 2>, scalar_prefetch = 0 : i64, scratch_operands = 1 : i64, tpu.core_type = #tpu.core_type<tc>, window_params = [{transform_indices = @transform_0, window_bounds = array<i64: 8, 128>}, {pipeline_mode = #tpu.pipeline_mode<synchronous>, transform_indices = @transform_1, window_bounds = array<i64: 2, 8>}, {pipeline_mode = #tpu.pipeline_mode<synchronous>, transform_indices = @transform_2, window_bounds = array<i64: 8, 128>}, {pipeline_mode = #tpu.pipeline_mode<synchronous>, transform_indices = @transform_3, window_bounds = array<i64: 1, 128>}, {pipeline_mode = #tpu.pipeline_mode<synchronous>, transform_indices = @transform_4, window_bounds = array<i64: 128, 256>}, {pipeline_mode = #tpu.pipeline_mode<synchronous>, transform_indices = @transform_5, window_bounds = array<i64: 1, 256>}, {pipeline_mode = #tpu.pipeline_mode<synchronous>, transform_indices = @transform_6, window_bounds = array<i64: 256, 128>}, {pipeline_mode = #tpu.pipeline_mode<synchronous>, transform_indices = @transform_7, window_bounds = array<i64: 1, 128>}, {transform_indices = @transform_8, window_bounds = array<i64: 2, 128>}]} {
    %c0_i32 = arith.constant 0 : i32
    %0 = arith.cmpi eq, %arg1, %c0_i32 : i32
    %1 = arith.extui %0 : i1 to i32
    %c0_i32_0 = arith.constant 0 : i32
    %2 = arith.cmpi ne, %1, %c0_i32_0 : i32
    scf.if %2 {
      %cst = arith.constant 0.000000e+00 : f32
      %10 = vector.broadcast %cst : f32 to vector<8x128xf32>
      %c0_7 = arith.constant 0 : index
      %c0_8 = arith.constant 0 : index
      %11 = vector.load %arg11[%c0_7, %c0_8] : memref<8x128xf32, #tpu.memory_space<vmem>>, vector<8x128xf32>
      tpu.vector_store %arg11[%c0_7, %c0_8], %10 {strides = array<i32>} : memref<8x128xf32, #tpu.memory_space<vmem>>, vector<8x128xf32>,
    } else {
    }
    %c0 = arith.constant 0 : index
    %c0_1 = arith.constant 0 : index
    %3 = vector.load %arg2[%c0, %c0_1] : memref<8x128xf32, #tpu.memory_space<vmem>>, vector<8x128xf32>
    %c0_2 = arith.constant 0 : index
    %c0_3 = arith.constant 0 : index
    %4 = vector.load %arg11[%c0_2, %c0_3] : memref<8x128xf32, #tpu.memory_space<vmem>>, vector<8x128xf32>
    %5 = arith.addf %4, %3 : vector<8x128xf32>
    %c0_4 = arith.constant 0 : index
    %c0_5 = arith.constant 0 : index
    %6 = vector.load %arg11[%c0_4, %c0_5] : memref<8x128xf32, #tpu.memory_space<vmem>>, vector<8x128xf32>
    tpu.vector_store %arg11[%c0_4, %c0_5], %5 {strides = array<i32>} : memref<8x128xf32, #tpu.memory_space<vmem>>, vector<8x128xf32>,
    %c1_i32 = arith.constant 1 : i32
    %7 = arith.cmpi eq, %arg1, %c1_i32 : i32
    %8 = arith.extui %7 : i1 to i32
    %c0_i32_6 = arith.constant 0 : i32
    %9 = arith.cmpi ne, %8, %c0_i32_6 : i32
    scf.if %9 {
      %c0_7 = arith.constant 0 : index
      %c0_8 = arith.constant 0 : index
      %10 = vector.load %arg11[%c0_7, %c0_8] : memref<8x128xf32, #tpu.memory_space<vmem>>, vector<8x128xf32>
      %cst = arith.constant dense<0.000000e+00> : vector<8xf32>
      %11 = vector.multi_reduction <add>, %10, %cst [1] : vector<8x128xf32> to vector<8xf32>
      %12 = vector.shape_cast %11 : vector<8xf32> to vector<8x1xf32>
      %cst_9 = arith.constant 3.906250e-03 : f32
      %13 = vector.broadcast %cst_9 : f32 to vector<8x1xf32>
      %14 = arith.mulf %12, %13 : vector<8x1xf32>
      %c0_10 = arith.constant 0 : index
      %c0_11 = arith.constant 0 : index
      %15 = vector.load %arg3[%c0_10, %c0_11] : memref<2x8xf32, #tpu.memory_space<vmem>>, vector<2x8xf32>
      %c0_12 = arith.constant 0 : index
      %c0_13 = arith.constant 0 : index
      %16 = vector.load %arg4[%c0_12, %c0_13] : memref<8x128xf32, #tpu.memory_space<vmem>>, vector<8x128xf32>
      %17 = vector.broadcast %14 : vector<8x1xf32> to vector<8x128xf32>
      %18 = arith.mulf %17, %16 : vector<8x128xf32>
      %cst_14 = arith.constant dense<0.000000e+00> : vector<2x128xf32>
      %19 = tpu.matmul %15, %18, %cst_14 {dimension_numbers = #tpu.dot_dimension_numbers<[1], [0], [0], [1], [0, 0, 1, 1], [], []>} : vector<2x8xf32>, vector<8x128xf32>, vector<2x128xf32> -> vector<2x128xf32>
      %c0_15 = arith.constant 0 : index
      %c0_16 = arith.constant 0 : index
      %20 = vector.load %arg5[%c0_15, %c0_16] : memref<1x128xf32, #tpu.memory_space<vmem>>, vector<1x128xf32>
      %21 = vector.broadcast %20 : vector<1x128xf32> to vector<2x128xf32>
      %22 = arith.addf %19, %21 : vector<2x128xf32>
      %cst_17 = arith.constant 0.000000e+00 : f32
      %23 = vector.broadcast %cst_17 : f32 to vector<2x128xf32>
      %24 = arith.maximumf %22, %23 : vector<2x128xf32>
      %c0_18 = arith.constant 0 : index
      %c0_19 = arith.constant 0 : index
      %25 = vector.load %arg6[%c0_18, %c0_19] : memref<128x256xf32, #tpu.memory_space<vmem>>, vector<128x256xf32>
      %cst_20 = arith.constant dense<0.000000e+00> : vector<2x256xf32>
      %26 = tpu.matmul %24, %25, %cst_20 {dimension_numbers = #tpu.dot_dimension_numbers<[1], [0], [0], [1], [0, 0, 1, 1], [], []>} : vector<2x128xf32>, vector<128x256xf32>, vector<2x256xf32> -> vector<2x256xf32>
      %c0_21 = arith.constant 0 : index
      %c0_22 = arith.constant 0 : index
      %27 = vector.load %arg7[%c0_21, %c0_22] : memref<1x256xf32, #tpu.memory_space<vmem>>, vector<1x256xf32>
      %28 = vector.broadcast %27 : vector<1x256xf32> to vector<2x256xf32>
      %29 = arith.addf %26, %28 : vector<2x256xf32>
      %cst_23 = arith.constant 0.000000e+00 : f32
      %30 = vector.broadcast %cst_23 : f32 to vector<2x256xf32>
      %31 = arith.maximumf %29, %30 : vector<2x256xf32>
      %c0_24 = arith.constant 0 : index
      %c0_25 = arith.constant 0 : index
      %32 = vector.load %arg8[%c0_24, %c0_25] : memref<256x128xf32, #tpu.memory_space<vmem>>, vector<256x128xf32>
      %cst_26 = arith.constant dense<0.000000e+00> : vector<2x128xf32>
      %33 = tpu.matmul %31, %32, %cst_26 {dimension_numbers = #tpu.dot_dimension_numbers<[1], [0], [0], [1], [0, 0, 1, 1], [], []>} : vector<2x256xf32>, vector<256x128xf32>, vector<2x128xf32> -> vector<2x128xf32>
      %c0_27 = arith.constant 0 : index
      %c0_28 = arith.constant 0 : index
      %34 = vector.load %arg9[%c0_27, %c0_28] : memref<1x128xf32, #tpu.memory_space<vmem>>, vector<1x128xf32>
      %35 = vector.broadcast %34 : vector<1x128xf32> to vector<2x128xf32>
      %36 = arith.addf %33, %35 : vector<2x128xf32>
      %c0_29 = arith.constant 0 : index
      %c0_30 = arith.constant 0 : index
      %37 = vector.load %arg10[%c0_29, %c0_30] : memref<2x128xf32, #tpu.memory_space<vmem>>, vector<2x128xf32>
      tpu.vector_store %arg10[%c0_29, %c0_30], %36 {strides = array<i32>} : memref<2x128xf32, #tpu.memory_space<vmem>>, vector<2x128xf32>,
    } else {
    }
    return
  }
  func.func @transform_0(%arg0: i32, %arg1: i32) -> (i32, i32) {
    %c0_i32 = arith.constant 0 : i32
    return %arg0, %arg1 : i32, i32
  }
  func.func @transform_1(%arg0: i32, %arg1: i32) -> (i32, i32) {
    %c0_i32 = arith.constant 0 : i32
    %c0_i32_0 = arith.constant 0 : i32
    %c0_i32_1 = arith.constant 0 : i32
    return %c0_i32, %c0_i32_0 : i32, i32
  }
  func.func @transform_2(%arg0: i32, %arg1: i32) -> (i32, i32) {
    %c0_i32 = arith.constant 0 : i32
    %c0_i32_0 = arith.constant 0 : i32
    %c0_i32_1 = arith.constant 0 : i32
    return %c0_i32, %c0_i32_0 : i32, i32
  }
  func.func @transform_3(%arg0: i32, %arg1: i32) -> (i32, i32) {
    %c0_i32 = arith.constant 0 : i32
    %c0_i32_0 = arith.constant 0 : i32
    %c0_i32_1 = arith.constant 0 : i32
    return %c0_i32, %c0_i32_0 : i32, i32
  }
  func.func @transform_4(%arg0: i32, %arg1: i32) -> (i32, i32) {
    %c0_i32 = arith.constant 0 : i32
    %c0_i32_0 = arith.constant 0 : i32
    %c0_i32_1 = arith.constant 0 : i32
    return %c0_i32, %c0_i32_0 : i32, i32
  }
  func.func @transform_5(%arg0: i32, %arg1: i32) -> (i32, i32) {
    %c0_i32 = arith.constant 0 : i32
    %c0_i32_0 = arith.constant 0 : i32
    %c0_i32_1 = arith.constant 0 : i32
    return %c0_i32, %c0_i32_0 : i32, i32
  }
  func.func @transform_6(%arg0: i32, %arg1: i32) -> (i32, i32) {
    %c0_i32 = arith.constant 0 : i32
    %c0_i32_0 = arith.constant 0 : i32
    %c0_i32_1 = arith.constant 0 : i32
    return %c0_i32, %c0_i32_0 : i32, i32
  }
  func.func @transform_7(%arg0: i32, %arg1: i32) -> (i32, i32) {
    %c0_i32 = arith.constant 0 : i32
    %c0_i32_0 = arith.constant 0 : i32
    %c0_i32_1 = arith.constant 0 : i32
    return %c0_i32, %c0_i32_0 : i32, i32
  }
  func.func @transform_8(%arg0: i32, %arg1: i32) -> (i32, i32) {
    %c0_i32 = arith.constant 0 : i32
    %c0_i32_0 = arith.constant 0 : i32
    return %arg0, %c0_i32 : i32, i32
  }
}

</mosaic_0001>

<llo_original>
// kernel: tpu_custom_call.1
$region0: #{tpu_custom_call.1}
  #allocation0 [shape = 'u32[]', space=smem, size = 0x4, offset = 0x4, fixed_abs, tag = 'smem constant byte address 0x4 - core index']
  #allocation1 [shape = 'u32[144,128]{1,0:T(1,128)}', space=vmem, size = 0x12000, scoped, tag = 'internal scratch']
  #allocation2 [shape = 'f32[8,128]{1,0:T(8,128)}', space=vmem, size = 0x1000, scoped, tag = 'scratch operand']
  %s0 = inlined_call_operand.hbm [shape: f32[8,256], index: 0, kind: input, shape index: {}]
  %s1 = inlined_call_operand.vmem [shape: f32[2,8], index: 1, kind: input, shape index: {}]
  %s2 = inlined_call_operand.hbm [shape: f32[8,128], index: 2, kind: input, shape index: {}]
  %s3 = inlined_call_operand.vmem [shape: f32[1,128], index: 3, kind: input, shape index: {}]
  %s4 = inlined_call_operand.hbm [shape: f32[128,256], index: 4, kind: input, shape index: {}]
  %s5 = inlined_call_operand.vmem [shape: f32[1,256], index: 5, kind: input, shape index: {}]
  %s6 = inlined_call_operand.hbm [shape: f32[256,128], index: 6, kind: input, shape index: {}]
  %s7 = inlined_call_operand.vmem [shape: f32[1,128], index: 7, kind: input, shape index: {}]
  %s8 = inlined_call_operand.hbm [shape: f32[2,128], index: 8, kind: output, shape index: {}]
  %s9 = sld [smem:[#allocation0]]
  $region89: #{tpu_custom_call.1} parent=0
    _
  %s11 = ssub.s32 1, %s9
  %s12 = scalar_select 0, %s11, %s9
  $region1: #{tpu_custom_call.1} parent=0
    #allocation3 [shape = 'u8[8192]{0}', space=vmem, size = 0x2000, scoped, tag = 'input window, operand 0']
    #allocation4 [shape = 's32[2]{0}', space=sflag, size = 0x8, scoped, tag = 'scoped memory for tpu_custom_call.1']
    #allocation5 [shape = 's32[2]{0}', space=sflag, size = 0x8, scoped, tag = 'scoped memory for tpu_custom_call.1']
    #allocation6 [shape = 'u8[4096]{0}', space=vmem, size = 0x1000, scoped, tag = 'input window, operand 2, single buffered']
    #allocation7 [shape = 's32[1]{0}', space=sflag, size = 0x4, scoped, tag = 'scoped memory for tpu_custom_call.1']
    #allocation8 [shape = 'u8[131072]{0}', space=vmem, size = 0x20000, scoped, tag = 'input window, operand 4, single buffered']
    #allocation9 [shape = 'u8[131072]{0}', space=vmem, size = 0x20000, scoped, tag = 'input window, operand 6, single buffered']
    #allocation10 [shape = 's32[1]{0}', space=sflag, size = 0x4, scoped, tag = 'scoped memory for tpu_custom_call.1']
    #allocation11 [shape = 'u8[1024]{0}', space=vmem, size = 0x400, scoped, tag = 'output window, operand 0, single buffered']
    %13 = vsyncpa [#allocation4], 0
    %s14 = scalar_lea.sflag [#allocation4], 1
    %15 = vsyncpa %s14, 0
    %16 = vsyncpa [#allocation7], 0
    %17 = vsyncpa [#allocation10], 0
    %18 = vsyncpa [#allocation5], 0
    loop: start=0, step=1, limit=4
    $region2: #{tpu_custom_call.1} parent=1 // loop_pre_header
      _
    $region3: #{tpu_custom_call.1} parent=1 // loop_header
      %s20 = sphi 0, %s24
      %p21 = scmp.ge.s32.totalorder %s20, 4
      %s27 = sphi 0, %s39
      %s28 = sphi 0, %s35
      %s29 = sphi 0, %s27
      %s30 = sphi 0, %s28
      %s31 = sphi 0, %s29
      %s32 = sphi 0, %s30
      %s44 = sphi 0, %s46
      %s47 = sphi 0, %s44
      %s48 = sphi 0, %s47
      %s64 = sphi 0, %s48
      %s68 = sphi 0, %s68
      %s70 = sphi 0, %s68
      %s71 = sphi 0, %s70
      %s85 = sphi 0, %s71
      %s89 = sphi 0, %s89
      %s91 = sphi 0, %s89
      %s92 = sphi 0, %s91
      %s106 = sphi 0, %s92
      %s110 = sphi 0, %s110
      %s112 = sphi 0, %s110
      %s113 = sphi 0, %s112
      %s127 = sphi 0, %s113
      %s131 = sphi 0, %s131
      %s133 = sphi 0, %s131
      %s134 = sphi 0, %s133
      %s148 = sphi 0, %s134
      %s152 = sphi 0, %s152
      %s154 = sphi 0, %s152
      %s155 = sphi 0, %s154
      %s169 = sphi 0, %s155
      %s173 = sphi 0, %s173
      %s175 = sphi 0, %s173
      %s176 = sphi 0, %s175
      %s190 = sphi 0, %s176
      %s194 = sphi 0, %s194
      %s196 = sphi 0, %s194
      %s197 = sphi 0, %s196
      %s211 = sphi 0, %s197
      %s217 = sphi 0, %s219
      %s220 = sphi 0, %s217
      %s221 = sphi 0, %s220
      %s237 = sphi 0, %s221
    $region4: #{tpu_custom_call.1} parent=1 // loop_header_branch
      %23 = sbr.rel (%p21) target = $region8
    $region5: #{tpu_custom_call.1} parent=1 // loop_body
      %s25 = ssub.s32 %s20, 1
      %s26 = ssub.s32 %s20, 2
      %s33 = sadd.s32 1, %s28
      %p34 = scmp.ge.s32.totalorder %s33, 2
      %s35 = scalar_select %p34, 0, %s33
      %s36 = sadd.s32 1, %s27
      %s37 = scalar_select %p34, %s36, %s27
      %p38 = scmp.ge.s32.totalorder %s37, 1
      %s39 = scalar_select %p38, 0, %s37
      %s40 = ssub.s32 %s27, %s39
      %s41 = ssub.s32 %s28, %s35
      %s42 = sor.u32 %s40, %s41
      %p43 = scmp.eq.s32.totalorder %s42, 0
      %s45 = sadd.s32 %s44, 1
      %s46 = scalar_select %p43, %s44, %s45
      %p49 = pneg %p43
      %p50 = scmp.eq.s32.totalorder %s20, 1
      %p51 = por %p49, %p50
      %p52 = scmp.ne.s32.totalorder %s44, %s47
      %p53 = scmp.eq.s32.totalorder %s20, 0
      %p54 = por %p52, %p53
      %p55 = scmp.ne.s32.totalorder %s44, %s47
      %p56 = scmp.eq.s32.totalorder %s25, 1
      %p57 = por %p55, %p56
      %p58 = scmp.ne.s32.totalorder %s47, %s48
      %p59 = scmp.eq.s32.totalorder %s25, 0
      %p60 = por %p58, %p59
      %p61 = scmp.ne.s32.totalorder %s47, %s48
      %p62 = scmp.eq.s32.totalorder %s26, 1
      %p63 = por %p61, %p62
      %p65 = scmp.ne.s32.totalorder %s48, %s64
      %p66 = scmp.eq.s32.totalorder %s26, 0
      %p67 = por %p65, %p66
      %s69 = sadd.s32 %s68, 1
      %p72 = scmp.eq.s32.totalorder %s20, 1
      %p73 = scmp.ne.s32.totalorder %s68, %s70
      %p74 = scmp.eq.s32.totalorder %s20, 0
      %p75 = por %p73, %p74
      %p76 = scmp.ne.s32.totalorder %s68, %s70
      %p77 = scmp.eq.s32.totalorder %s25, 1
      %p78 = por %p76, %p77
      %p79 = scmp.ne.s32.totalorder %s70, %s71
      %p80 = scmp.eq.s32.totalorder %s25, 0
      %p81 = por %p79, %p80
      %p82 = scmp.ne.s32.totalorder %s70, %s71
      %p83 = scmp.eq.s32.totalorder %s26, 1
      %p84 = por %p82, %p83
      %p86 = scmp.ne.s32.totalorder %s71, %s85
      %p87 = scmp.eq.s32.totalorder %s26, 0
      %p88 = por %p86, %p87
      %s90 = sadd.s32 %s89, 1
      %p93 = scmp.eq.s32.totalorder %s20, 1
      %p94 = scmp.ne.s32.totalorder %s89, %s91
      %p95 = scmp.eq.s32.totalorder %s20, 0
      %p96 = por %p94, %p95
      %p97 = scmp.ne.s32.totalorder %s89, %s91
      %p98 = scmp.eq.s32.totalorder %s25, 1
      %p99 = por %p97, %p98
      %p100 = scmp.ne.s32.totalorder %s91, %s92
      %p101 = scmp.eq.s32.totalorder %s25, 0
      %p102 = por %p100, %p101
      %p103 = scmp.ne.s32.totalorder %s91, %s92
      %p104 = scmp.eq.s32.totalorder %s26, 1
      %p105 = por %p103, %p104
      %p107 = scmp.ne.s32.totalorder %s92, %s106
      %p108 = scmp.eq.s32.totalorder %s26, 0
      %p109 = por %p107, %p108
      %s111 = sadd.s32 %s110, 1
      %p114 = scmp.eq.s32.totalorder %s20, 1
      %p115 = scmp.ne.s32.totalorder %s110, %s112
      %p116 = scmp.eq.s32.totalorder %s20, 0
      %p117 = por %p115, %p116
      %p118 = scmp.ne.s32.totalorder %s110, %s112
      %p119 = scmp.eq.s32.totalorder %s25, 1
      %p120 = por %p118, %p119
      %p121 = scmp.ne.s32.totalorder %s112, %s113
      %p122 = scmp.eq.s32.totalorder %s25, 0
      %p123 = por %p121, %p122
      %p124 = scmp.ne.s32.totalorder %s112, %s113
      %p125 = scmp.eq.s32.totalorder %s26, 1
      %p126 = por %p124, %p125
      %p128 = scmp.ne.s32.totalorder %s113, %s127
      %p129 = scmp.eq.s32.totalorder %s26, 0
      %p130 = por %p128, %p129
      %s132 = sadd.s32 %s131, 1
      %p135 = scmp.eq.s32.totalorder %s20, 1
      %p136 = scmp.ne.s32.totalorder %s131, %s133
      %p137 = scmp.eq.s32.totalorder %s20, 0
      %p138 = por %p136, %p137
      %p139 = scmp.ne.s32.totalorder %s131, %s133
      %p140 = scmp.eq.s32.totalorder %s25, 1
      %p141 = por %p139, %p140
      %p142 = scmp.ne.s32.totalorder %s133, %s134
      %p143 = scmp.eq.s32.totalorder %s25, 0
      %p144 = por %p142, %p143
      %p145 = scmp.ne.s32.totalorder %s133, %s134
      %p146 = scmp.eq.s32.totalorder %s26, 1
      %p147 = por %p145, %p146
      %p149 = scmp.ne.s32.totalorder %s134, %s148
      %p150 = scmp.eq.s32.totalorder %s26, 0
      %p151 = por %p149, %p150
      %s153 = sadd.s32 %s152, 1
      %p156 = scmp.eq.s32.totalorder %s20, 1
      %p157 = scmp.ne.s32.totalorder %s152, %s154
      %p158 = scmp.eq.s32.totalorder %s20, 0
      %p159 = por %p157, %p158
      %p160 = scmp.ne.s32.totalorder %s152, %s154
      %p161 = scmp.eq.s32.totalorder %s25, 1
      %p162 = por %p160, %p161
      %p163 = scmp.ne.s32.totalorder %s154, %s155
      %p164 = scmp.eq.s32.totalorder %s25, 0
      %p165 = por %p163, %p164
      %p166 = scmp.ne.s32.totalorder %s154, %s155
      %p167 = scmp.eq.s32.totalorder %s26, 1
      %p168 = por %p166, %p167
      %p170 = scmp.ne.s32.totalorder %s155, %s169
      %p171 = scmp.eq.s32.totalorder %s26, 0
      %p172 = por %p170, %p171
      %s174 = sadd.s32 %s173, 1
      %p177 = scmp.eq.s32.totalorder %s20, 1
      %p178 = scmp.ne.s32.totalorder %s173, %s175
      %p179 = scmp.eq.s32.totalorder %s20, 0
      %p180 = por %p178, %p179
      %p181 = scmp.ne.s32.totalorder %s173, %s175
      %p182 = scmp.eq.s32.totalorder %s25, 1
      %p183 = por %p181, %p182
      %p184 = scmp.ne.s32.totalorder %s175, %s176
      %p185 = scmp.eq.s32.totalorder %s25, 0
      %p186 = por %p184, %p185
      %p187 = scmp.ne.s32.totalorder %s175, %s176
      %p188 = scmp.eq.s32.totalorder %s26, 1
      %p189 = por %p187, %p188
      %p191 = scmp.ne.s32.totalorder %s176, %s190
      %p192 = scmp.eq.s32.totalorder %s26, 0
      %p193 = por %p191, %p192
      %s195 = sadd.s32 %s194, 1
      %p198 = scmp.eq.s32.totalorder %s20, 1
      %p199 = scmp.ne.s32.totalorder %s194, %s196
      %p200 = scmp.eq.s32.totalorder %s20, 0
      %p201 = por %p199, %p200
      %p202 = scmp.ne.s32.totalorder %s194, %s196
      %p203 = scmp.eq.s32.totalorder %s25, 1
      %p204 = por %p202, %p203
      %p205 = scmp.ne.s32.totalorder %s196, %s197
      %p206 = scmp.eq.s32.totalorder %s25, 0
      %p207 = por %p205, %p206
      %p208 = scmp.ne.s32.totalorder %s196, %s197
      %p209 = scmp.eq.s32.totalorder %s26, 1
      %p210 = por %p208, %p209
      %p212 = scmp.ne.s32.totalorder %s197, %s211
      %p213 = scmp.eq.s32.totalorder %s26, 0
      %p214 = por %p212, %p213
      %s215 = ssub.s32 %s27, %s39
      %p216 = scmp.eq.s32.totalorder %s215, 0
      %s218 = sadd.s32 %s217, 1
      %s219 = scalar_select %p216, %s217, %s218
      %p222 = pneg %p216
      %p223 = scmp.eq.s32.totalorder %s20, 1
      %p224 = por %p222, %p223
      %p225 = scmp.ne.s32.totalorder %s217, %s220
      %p226 = scmp.eq.s32.totalorder %s20, 0
      %p227 = por %p225, %p226
      %p228 = scmp.ne.s32.totalorder %s217, %s220
      %p229 = scmp.eq.s32.totalorder %s25, 1
      %p230 = por %p228, %p229
      %p231 = scmp.ne.s32.totalorder %s220, %s221
      %p232 = scmp.eq.s32.totalorder %s25, 0
      %p233 = por %p231, %p232
      %p234 = scmp.ne.s32.totalorder %s220, %s221
      %p235 = scmp.eq.s32.totalorder %s26, 1
      %p236 = por %p234, %p235
      %p238 = scmp.ne.s32.totalorder %s221, %s237
      %p239 = scmp.eq.s32.totalorder %s26, 0
      %p240 = por %p238, %p239
      %p241 = scmp.le.s32.totalorder 1, %s20
      %p242 = scmp.lt.s32.totalorder %s20, 3
      %p243 = pnand %p241, %p242
      %p244 = pneg %p243
      // Predicated region
      $region9: #{tpu_custom_call.1} parent=5 // pred_check
        _
      $region10: #{tpu_custom_call.1} parent=5 // pred_check_branch
        %246 = sbr.rel (%p243) target = $region12
      $region11: #{tpu_custom_call.1} parent=5 // pred_region
        %s247 = ssub.s32 %s20, 1
        // Predicated region
        $region13: #{tpu_custom_call.1} parent=11 // pred_check
          %p248 = pneg %p81
        $region14: #{tpu_custom_call.1} parent=11 // pred_check_branch
          %250 = sbr.rel (%p248) target = $region16
        $region15: #{tpu_custom_call.1} parent=11 // pred_region
          _
        $region16: #{tpu_custom_call.1} parent=11 // pred_fallthru
          _
        // Predicated region
        $region17: #{tpu_custom_call.1} parent=11 // pred_check
          %p251 = pneg %p102
        $region18: #{tpu_custom_call.1} parent=11 // pred_check_branch
          %253 = sbr.rel (%p251) target = $region20
        $region19: #{tpu_custom_call.1} parent=11 // pred_region
          %s255 = ssub.s32 128, 128
          %256 = vsyncadd [#allocation7], %s255
          %s258 = sshll.u32 [#allocation6], 4
          %s259 = int_to_ptr.vmem [resolvable:$true] %s258
          %261 = dma.hbm_to_vmem [thread:$0]  %s2, 128, %s259, [#allocation7]
        $region20: #{tpu_custom_call.1} parent=11 // pred_fallthru
          _
        // Predicated region
        $region21: #{tpu_custom_call.1} parent=11 // pred_check
          %p262 = pneg %p123
        $region22: #{tpu_custom_call.1} parent=11 // pred_check_branch
          %264 = sbr.rel (%p262) target = $region24
        $region23: #{tpu_custom_call.1} parent=11 // pred_region
          _
        $region24: #{tpu_custom_call.1} parent=11 // pred_fallthru
          _
        // Predicated region
        $region25: #{tpu_custom_call.1} parent=11 // pred_check
          %p265 = pneg %p144
        $region26: #{tpu_custom_call.1} parent=11 // pred_check_branch
          %267 = sbr.rel (%p265) target = $region28
        $region27: #{tpu_custom_call.1} parent=11 // pred_region
          %s269 = ssub.s32 4096, 4096
          %270 = vsyncadd [#allocation7], %s269
          %s271 = sshll.u32 [#allocation8], 4
          %s272 = int_to_ptr.vmem [resolvable:$true] %s271
          %277 = dma.hbm_to_vmem [thread:$0]  %s4, 4096, %s272, [#allocation7], 256, 256, 16
        $region28: #{tpu_custom_call.1} parent=11 // pred_fallthru
          _
        // Predicated region
        $region29: #{tpu_custom_call.1} parent=11 // pred_check
          %p278 = pneg %p165
        $region30: #{tpu_custom_call.1} parent=11 // pred_check_branch
          %280 = sbr.rel (%p278) target = $region32
        $region31: #{tpu_custom_call.1} parent=11 // pred_region
          _
        $region32: #{tpu_custom_call.1} parent=11 // pred_fallthru
          _
        // Predicated region
        $region33: #{tpu_custom_call.1} parent=11 // pred_check
          %p281 = pneg %p186
        $region34: #{tpu_custom_call.1} parent=11 // pred_check_branch
          %283 = sbr.rel (%p281) target = $region36
        $region35: #{tpu_custom_call.1} parent=11 // pred_region
          %s285 = ssub.s32 4096, 4096
          %286 = vsyncadd [#allocation10], %s285
          %s287 = sshll.u32 [#allocation9], 4
          %s288 = int_to_ptr.vmem [resolvable:$true] %s287
          %293 = dma.hbm_to_vmem [thread:$0]  %s6, 4096, %s288, [#allocation10], 128, 128, 8
        $region36: #{tpu_custom_call.1} parent=11 // pred_fallthru
          _
        // Predicated region
        $region37: #{tpu_custom_call.1} parent=11 // pred_check
          %p294 = pneg %p207
        $region38: #{tpu_custom_call.1} parent=11 // pred_check_branch
          %296 = sbr.rel (%p294) target = $region40
        $region39: #{tpu_custom_call.1} parent=11 // pred_region
          _
        $region40: #{tpu_custom_call.1} parent=11 // pred_fallthru
          _
      $region12: #{tpu_custom_call.1} parent=5 // pred_fallthru
        _
      %p297 = scmp.lt.s32.totalorder %s20, 2
      // Predicated region
      $region41: #{tpu_custom_call.1} parent=5 // pred_check
        %p298 = pneg %p297
      $region42: #{tpu_custom_call.1} parent=5 // pred_check_branch
        %300 = sbr.rel (%p298) target = $region44
      $region43: #{tpu_custom_call.1} parent=5 // pred_region
        // Predicated region
        $region45: #{tpu_custom_call.1} parent=43 // pred_check
          %p301 = pneg %p54
        $region46: #{tpu_custom_call.1} parent=43 // pred_check_branch
          %303 = sbr.rel (%p301) target = $region48
        $region47: #{tpu_custom_call.1} parent=43 // pred_region
          %s304 = sand.u32 %s44, 1
          %s305 = scalar_lea.sflag [#allocation4], %s304
          %s306 = sand.u32 %s44, 1
          %s307 = smul.addr %s306, 8
          %s308 = scalar_lea.vmem [#allocation3], %s307
          %s310 = ssub.s32 128, 128
          %311 = vsyncadd %s305, %s310
          %s312 = smul.addr %s27, 2
          %s313 = sadd.s32 %s28, %s312
          %s314 = smul.addr %s313, 128
          %s315 = scalar_lea.hbm %s0, %s314
          %s317 = sshll.u32 %s308, 4
          %s318 = int_to_ptr.vmem [resolvable:$true] %s317
          %320 = dma.hbm_to_vmem [thread:$0]  %s315, 128, %s318, %s305
        $region48: #{tpu_custom_call.1} parent=43 // pred_fallthru
          _
      $region44: #{tpu_custom_call.1} parent=5 // pred_fallthru
        _
      %p321 = scmp.le.s32.totalorder 1, %s20
      %p322 = scmp.lt.s32.totalorder %s20, 3
      %p323 = pnand %p321, %p322
      %p324 = pneg %p323
      // Predicated region
      $region49: #{tpu_custom_call.1} parent=5 // pred_check
        _
      $region50: #{tpu_custom_call.1} parent=5 // pred_check_branch
        %326 = sbr.rel (%p323) target = $region52
      $region51: #{tpu_custom_call.1} parent=5 // pred_region
        %s327 = ssub.s32 %s20, 1
        %s328 = sand.u32 %s47, 1
        %s329 = scalar_lea.sflag [#allocation4], %s328
        %s330 = sand.u32 %s47, 1
        %s331 = smul.addr %s330, 8
        %s332 = scalar_lea.vmem [#allocation3], %s331
        // Predicated region
        $region53: #{tpu_custom_call.1} parent=51 // pred_check
          %p333 = pneg %p60
        $region54: #{tpu_custom_call.1} parent=51 // pred_check_branch
          %335 = sbr.rel (%p333) target = $region56
        $region55: #{tpu_custom_call.1} parent=51 // pred_region
          %336 = dma.done %s329, 128
        $region56: #{tpu_custom_call.1} parent=51 // pred_fallthru
          _
        // Predicated region
        $region57: #{tpu_custom_call.1} parent=51 // pred_check
          %p337 = pneg %p102
        $region58: #{tpu_custom_call.1} parent=51 // pred_check_branch
          %339 = sbr.rel (%p337) target = $region60
        $region59: #{tpu_custom_call.1} parent=51 // pred_region
          %340 = dma.done [#allocation7], 128
        $region60: #{tpu_custom_call.1} parent=51 // pred_fallthru
          _
        // Predicated region
        $region61: #{tpu_custom_call.1} parent=51 // pred_check
          %p341 = pneg %p144
        $region62: #{tpu_custom_call.1} parent=51 // pred_check_branch
          %343 = sbr.rel (%p341) target = $region64
        $region63: #{tpu_custom_call.1} parent=51 // pred_region
          %344 = dma.done [#allocation7], 4096
        $region64: #{tpu_custom_call.1} parent=51 // pred_fallthru
          _
        // Predicated region
        $region65: #{tpu_custom_call.1} parent=51 // pred_check
          %p345 = pneg %p186
        $region66: #{tpu_custom_call.1} parent=51 // pred_check_branch
          %347 = sbr.rel (%p345) target = $region68
        $region67: #{tpu_custom_call.1} parent=51 // pred_region
          %348 = dma.done [#allocation10], 4096
        $region68: #{tpu_custom_call.1} parent=51 // pred_fallthru
          _
        %s349 = sand.u32 %s47, 1
        %s350 = scalar_lea.sflag [#allocation4], %s349
        %s351 = sand.u32 %s47, 1
        %s352 = smul.addr %s351, 8
        %s353 = scalar_lea.vmem [#allocation3], %s352
        %p354 = pneg %p60
        %p355 = pneg %p57
        %p356 = pneg %p81
        %p357 = pneg %p78
        %p358 = pneg %p102
        %p359 = pneg %p99
        %p360 = pneg %p123
        %p361 = pneg %p120
        %p362 = pneg %p144
        %p363 = pneg %p141
        %p364 = pneg %p165
        %p365 = pneg %p162
        %p366 = pneg %p186
        %p367 = pneg %p183
        %p368 = pneg %p207
        %p369 = pneg %p204
        %p370 = pneg %p233
        %p371 = pneg %p230
        %p372 = scmp.eq.s32.totalorder %s30, 0
        // Predicated region
        $region69: #{tpu_custom_call.1} parent=51 // pred_check
          %p373 = pneg %p372
        $region70: #{tpu_custom_call.1} parent=51 // pred_check_branch
          %375 = sbr.rel (%p373) target = $region72
        $region71: #{tpu_custom_call.1} parent=51 // pred_region
          %376 = vst [vmem:[#allocation2] sm:$0xff] 0.0
        $region72: #{tpu_custom_call.1} parent=51 // pred_fallthru
          _
        %v377 = vld [vmem:[%s332] sm:$0xff]
        %v378 = vld [vmem:[#allocation2] sm:$0xff]
        %v379 = vadd.f32 %v378, %v377
        %380 = vst [vmem:[#allocation2] sm:$0xff] %v379
        %p381 = scmp.eq.s32.totalorder %s30, 1
        // Predicated region
        $region73: #{tpu_custom_call.1} parent=51 // pred_check
          %p382 = pneg %p381
        $region74: #{tpu_custom_call.1} parent=51 // pred_check_branch
          %384 = sbr.rel (%p382) target = $region76
        $region75: #{tpu_custom_call.1} parent=51 // pred_region
          %v385 = vld [vmem:[#allocation2] sm:$0xff]
          %386 = vadd.xlane.f32.xlu0 %v385
          %v387 = vpop.xlane.xlu0 %386
          %v388 = vmul.f32 %v387, 0.00390625
          %v389 = vld [vmem:[%s1] sm:$0x3]
          %v390 = vld [vmem:[#allocation6] sm:$0xff]
          %v391 = vmul.f32 %v388, %v390
          %v392 = vld [vmem:[%s3] sm:$0x1]
          %v394 = vlaneseq
          %v395 = vshrl.u32 %v394, 7
          %v396 = vsub.s32 0, %v395
          %v397 = vrot.slane %v392, %v396
          %vm399 = vcmask 64512
          %v401 = vsel %vm399, %v389, 0
          %403 = vmatprep.subr.mxu0 0.0
          %404 = vmatpush1.msra.mxu0 %v391
          %405 = vmatprep.subr.mxu0 0.0
          %406 = vmatpush1.msra.mxu0 0.0
          %407 = vmatprep.subr.mxu0 0.0
          %408 = vmatpush1.msra.mxu0 0.0
          %409 = vmatprep.subr.mxu0 0.0
          %410 = vmatpush1.msra.mxu0 0.0
          %411 = vmatprep.subr.mxu0 0.0
          %412 = vmatpush1.msra.mxu0 0.0
          %413 = vmatprep.subr.mxu0 0.0
          %414 = vmatpush1.msra.mxu0 0.0
          %415 = vmatprep.subr.mxu0 0.0
          %416 = vmatpush1.msra.mxu0 0.0
          %417 = vmatprep.subr.mxu0 0.0
          %418 = vmatpush1.msra.mxu0 0.0
          %419 = vmatprep.subr.mxu0 0.0
          %420 = vmatpush1.msra.mxu0 0.0
          %421 = vmatprep.subr.mxu0 0.0
          %422 = vmatpush1.msra.mxu0 0.0
          %423 = vmatprep.subr.mxu0 0.0
          %424 = vmatpush1.msra.mxu0 0.0
          %425 = vmatprep.subr.mxu0 0.0
          %426 = vmatpush1.msra.mxu0 0.0
          %427 = vmatprep.subr.mxu0 0.0
          %428 = vmatpush1.msra.mxu0 0.0
          %429 = vmatprep.subr.mxu0 0.0
          %430 = vmatpush1.msra.mxu0 0.0
          %431 = vmatprep.subr.mxu0 0.0
          %432 = vmatpush1.msra.mxu0 0.0
          %433 = vmatprep.subr.mxu0 0.0
          %434 = vmatpush1.msra.mxu0 0.0
          %435 = vmatprep.subr.mxu0 0.0
          %436 = vmatpush1.msra.mxu0 0.0
          %437 = vmatprep.subr.mxu0 0.0
          %438 = vmatpush1.msra.mxu0 0.0
          %439 = vmatprep.subr.mxu0 0.0
          %440 = vmatpush1.msra.mxu0 0.0
          %441 = vmatprep.subr.mxu0 0.0
          %442 = vmatpush1.msra.mxu0 0.0
          %443 = vmatprep.subr.mxu0 0.0
          %444 = vmatpush1.msra.mxu0 0.0
          %445 = vmatprep.subr.mxu0 0.0
          %446 = vmatpush1.msra.mxu0 0.0
          %447 = vmatprep.subr.mxu0 0.0
          %448 = vmatpush1.msra.mxu0 0.0
          %449 = vmatprep.subr.mxu0 0.0
          %450 = vmatpush1.msra.mxu0 0.0
          %451 = vmatprep.subr.mxu0 0.0
          %452 = vmatpush1.msra.mxu0 0.0
          %453 = vmatprep.subr.mxu0 0.0
          %454 = vmatpush1.msra.mxu0 0.0
          %455 = vmatprep.subr.mxu0 0.0
          %456 = vmatpush1.msra.mxu0 0.0
          %457 = vmatprep.subr.mxu0 0.0
          %458 = vmatpush1.msra.mxu0 0.0
          %459 = vmatprep.subr.mxu0 0.0
          %460 = vmatpush1.msra.mxu0 0.0
          %461 = vmatprep.subr.mxu0 0.0
          %462 = vmatpush1.msra.mxu0 0.0
          %463 = vmatprep.subr.mxu0 0.0
          %464 = vmatpush1.msra.mxu0 0.0
          %465 = vmatprep.subr.mxu0 0.0
          %466 = vmatpush1.msra.mxu0 0.0
          %467 = vmatprep.mubr.f32.mxu0 0.0
          %468 = vmatmul.mubr.f32.gmra.mrb[0].mxu0 %v401
          %v469 = vpop.f32.mrb[0].mxu0
          %v470 = vadd.f32 %v397, %v469
          %v471 = vpop.f32.mrb[0].mxu0
          %472 = vdwg.mxu0
          %v473 = vmax.f32 %v470, 0.0
          %v474 = vld [vmem:[#allocation8] sm:$0xff]
          %v475 = vld [vmem:[#allocation8 + $0x8] sm:$0xff]
          %v476 = vld [vmem:[#allocation8 + $0x10] sm:$0xff]
          %v477 = vld [vmem:[#allocation8 + $0x18] sm:$0xff]
          %v478 = vld [vmem:[#allocation8 + $0x20] sm:$0xff]
          %v479 = vld [vmem:[#allocation8 + $0x28] sm:$0xff]
          %v480 = vld [vmem:[#allocation8 + $0x30] sm:$0xff]
          %v481 = vld [vmem:[#allocation8 + $0x38] sm:$0xff]
          %v482 = vld [vmem:[#allocation8 + $0x40] sm:$0xff]
          %v483 = vld [vmem:[#allocation8 + $0x48] sm:$0xff]
          %v484 = vld [vmem:[#allocation8 + $0x50] sm:$0xff]
          %v485 = vld [vmem:[#allocation8 + $0x58] sm:$0xff]
          %v486 = vld [vmem:[#allocation8 + $0x60] sm:$0xff]
          %v487 = vld [vmem:[#allocation8 + $0x68] sm:$0xff]
          %v488 = vld [vmem:[#allocation8 + $0x70] sm:$0xff]
          %v489 = vld [vmem:[#allocation8 + $0x78] sm:$0xff]
          %v490 = vld [vmem:[#allocation8 + $0x80] sm:$0xff]
          %v491 = vld [vmem:[#allocation8 + $0x88] sm:$0xff]
          %v492 = vld [vmem:[#allocation8 + $0x90] sm:$0xff]
          %v493 = vld [vmem:[#allocation8 + $0x98] sm:$0xff]
          %v494 = vld [vmem:[#allocation8 + $0xa0] sm:$0xff]
          %v495 = vld [vmem:[#allocation8 + $0xa8] sm:$0xff]
          %v496 = vld [vmem:[#allocation8 + $0xb0] sm:$0xff]
          %v497 = vld [vmem:[#allocation8 + $0xb8] sm:$0xff]
          %v498 = vld [vmem:[#allocation8 + $0xc0] sm:$0xff]
          %v499 = vld [vmem:[#allocation8 + $0xc8] sm:$0xff]
          %v500 = vld [vmem:[#allocation8 + $0xd0] sm:$0xff]
          %v501 = vld [vmem:[#allocation8 + $0xd8] sm:$0xff]
          %v502 = vld [vmem:[#allocation8 + $0xe0] sm:$0xff]
          %v503 = vld [vmem:[#allocation8 + $0xe8] sm:$0xff]
          %v504 = vld [vmem:[#allocation8 + $0xf0] sm:$0xff]
          %v505 = vld [vmem:[#allocation8 + $0xf8] sm:$0xff]
          %v506 = vld [vmem:[%s5] sm:$0x3]
          %v508 = vlaneseq
          %v509 = vshrl.u32 %v508, 7
          %v510 = vsub.s32 0, %v509
          %v511 = vrot.slane %v506, %v510
          %v512 = vlaneseq
          %v513 = vshrl.u32 %v512, 7
          %v514 = vsub.s32 1, %v513
          %v515 = vrot.slane %v506, %v514
          %518 = vmatprep.subr.mxu0 %v475
          %519 = vmatpush1.msra.mxu0 %v474
          %520 = vmatprep.subr.mxu0 %v477
          %521 = vmatpush1.msra.mxu0 %v476
          %522 = vmatprep.subr.mxu0 %v479
          %523 = vmatpush1.msra.mxu0 %v478
          %524 = vmatprep.subr.mxu0 %v481
          %525 = vmatpush1.msra.mxu0 %v480
          %526 = vmatprep.subr.mxu0 %v483
          %527 = vmatpush1.msra.mxu0 %v482
          %528 = vmatprep.subr.mxu0 %v485
          %529 = vmatpush1.msra.mxu0 %v484
          %530 = vmatprep.subr.mxu0 %v487
          %531 = vmatpush1.msra.mxu0 %v486
          %532 = vmatprep.subr.mxu0 %v489
          %533 = vmatpush1.msra.mxu0 %v488
          %534 = vmatprep.subr.mxu0 %v491
          %535 = vmatpush1.msra.mxu0 %v490
          %536 = vmatprep.subr.mxu0 %v493
          %537 = vmatpush1.msra.mxu0 %v492
          %538 = vmatprep.subr.mxu0 %v495
          %539 = vmatpush1.msra.mxu0 %v494
          %540 = vmatprep.subr.mxu0 %v497
          %541 = vmatpush1.msra.mxu0 %v496
          %542 = vmatprep.subr.mxu0 %v499
          %543 = vmatpush1.msra.mxu0 %v498
          %544 = vmatprep.subr.mxu0 %v501
          %545 = vmatpush1.msra.mxu0 %v500
          %546 = vmatprep.subr.mxu0 %v503
          %547 = vmatpush1.msra.mxu0 %v502
          %548 = vmatprep.subr.mxu0 %v505
          %549 = vmatpush1.msra.mxu0 %v504
          %550 = vmatprep.subr.mxu0 0.0
          %551 = vmatpush1.msra.mxu0 0.0
          %552 = vmatprep.subr.mxu0 0.0
          %553 = vmatpush1.msra.mxu0 0.0
          %554 = vmatprep.subr.mxu0 0.0
          %555 = vmatpush1.msra.mxu0 0.0
          %556 = vmatprep.subr.mxu0 0.0
          %557 = vmatpush1.msra.mxu0 0.0
          %558 = vmatprep.subr.mxu0 0.0
          %559 = vmatpush1.msra.mxu0 0.0
          %560 = vmatprep.subr.mxu0 0.0
          %561 = vmatpush1.msra.mxu0 0.0
          %562 = vmatprep.subr.mxu0 0.0
          %563 = vmatpush1.msra.mxu0 0.0
          %564 = vmatprep.subr.mxu0 0.0
          %565 = vmatpush1.msra.mxu0 0.0
          %566 = vmatprep.subr.mxu0 0.0
          %567 = vmatpush1.msra.mxu0 0.0
          %568 = vmatprep.subr.mxu0 0.0
          %569 = vmatpush1.msra.mxu0 0.0
          %570 = vmatprep.subr.mxu0 0.0
          %571 = vmatpush1.msra.mxu0 0.0
          %572 = vmatprep.subr.mxu0 0.0
          %573 = vmatpush1.msra.mxu0 0.0
          %574 = vmatprep.subr.mxu0 0.0
          %575 = vmatpush1.msra.mxu0 0.0
          %576 = vmatprep.subr.mxu0 0.0
          %577 = vmatpush1.msra.mxu0 0.0
          %578 = vmatprep.subr.mxu0 0.0
          %579 = vmatpush1.msra.mxu0 0.0
          %580 = vmatprep.subr.mxu0 0.0
          %581 = vmatpush1.msra.mxu0 0.0
          %582 = vmatprep.mubr.f32.mxu0 0.0
          %583 = vmatmul.mubr.f32.gmra.mrb[0].mxu0 %v473
          %v584 = vpop.f32.mrb[0].mxu0
          %v585 = vadd.f32 %v511, %v584
          %v586 = vpop.f32.mrb[0].mxu0
          %v587 = vadd.f32 %v515, %v586
          %588 = vdwg.mxu0
          %v589 = vmax.f32 %v585, 0.0
          %v590 = vmax.f32 %v587, 0.0
          %v591 = vld [vmem:[#allocation9] sm:$0xff]
          %v592 = vld [vmem:[#allocation9 + $0x8] sm:$0xff]
          %v593 = vld [vmem:[#allocation9 + $0x10] sm:$0xff]
          %v594 = vld [vmem:[#allocation9 + $0x18] sm:$0xff]
          %v595 = vld [vmem:[#allocation9 + $0x20] sm:$0xff]
          %v596 = vld [vmem:[#allocation9 + $0x28] sm:$0xff]
          %v597 = vld [vmem:[#allocation9 + $0x30] sm:$0xff]
          %v598 = vld [vmem:[#allocation9 + $0x38] sm:$0xff]
          %v599 = vld [vmem:[#allocation9 + $0x40] sm:$0xff]
          %v600 = vld [vmem:[#allocation9 + $0x48] sm:$0xff]
          %v601 = vld [vmem:[#allocation9 + $0x50] sm:$0xff]
          %v602 = vld [vmem:[#allocation9 + $0x58] sm:$0xff]
          %v603 = vld [vmem:[#allocation9 + $0x60] sm:$0xff]
          %v604 = vld [vmem:[#allocation9 + $0x68] sm:$0xff]
          %v605 = vld [vmem:[#allocation9 + $0x70] sm:$0xff]
          %v606 = vld [vmem:[#allocation9 + $0x78] sm:$0xff]
          %v607 = vld [vmem:[#allocation9 + $0x80] sm:$0xff]
          %v608 = vld [vmem:[#allocation9 + $0x88] sm:$0xff]
          %v609 = vld [vmem:[#allocation9 + $0x90] sm:$0xff]
          %v610 = vld [vmem:[#allocation9 + $0x98] sm:$0xff]
          %v611 = vld [vmem:[#allocation9 + $0xa0] sm:$0xff]
          %v612 = vld [vmem:[#allocation9 + $0xa8] sm:$0xff]
          %v613 = vld [vmem:[#allocation9 + $0xb0] sm:$0xff]
          %v614 = vld [vmem:[#allocation9 + $0xb8] sm:$0xff]
          %v615 = vld [vmem:[#allocation9 + $0xc0] sm:$0xff]
          %v616 = vld [vmem:[#allocation9 + $0xc8] sm:$0xff]
          %v617 = vld [vmem:[#allocation9 + $0xd0] sm:$0xff]
          %v618 = vld [vmem:[#allocation9 + $0xd8] sm:$0xff]
          %v619 = vld [vmem:[#allocation9 + $0xe0] sm:$0xff]
          %v620 = vld [vmem:[#allocation9 + $0xe8] sm:$0xff]
          %v621 = vld [vmem:[#allocation9 + $0xf0] sm:$0xff]
          %v622 = vld [vmem:[#allocation9 + $0xf8] sm:$0xff]
          %v623 = vld [vmem:[%s7] sm:$0x1]
          %v625 = vlaneseq
          %v626 = vshrl.u32 %v625, 7
          %v627 = vsub.s32 0, %v626
          %v628 = vrot.slane %v623, %v627
          %630 = vmatprep.subr.mxu0 0.0
          %631 = vmatpush1.msra.mxu0 %v591
          %632 = vmatprep.subr.mxu0 0.0
          %633 = vmatpush1.msra.mxu0 %v592
          %634 = vmatprep.subr.mxu0 0.0
          %635 = vmatpush1.msra.mxu0 %v593
          %636 = vmatprep.subr.mxu0 0.0
          %637 = vmatpush1.msra.mxu0 %v594
          %638 = vmatprep.subr.mxu0 0.0
          %639 = vmatpush1.msra.mxu0 %v595
          %640 = vmatprep.subr.mxu0 0.0
          %641 = vmatpush1.msra.mxu0 %v596
          %642 = vmatprep.subr.mxu0 0.0
          %643 = vmatpush1.msra.mxu0 %v597
          %644 = vmatprep.subr.mxu0 0.0
          %645 = vmatpush1.msra.mxu0 %v598
          %646 = vmatprep.subr.mxu0 0.0
          %647 = vmatpush1.msra.mxu0 %v599
          %648 = vmatprep.subr.mxu0 0.0
          %649 = vmatpush1.msra.mxu0 %v600
          %650 = vmatprep.subr.mxu0 0.0
          %651 = vmatpush1.msra.mxu0 %v601
          %652 = vmatprep.subr.mxu0 0.0
          %653 = vmatpush1.msra.mxu0 %v602
          %654 = vmatprep.subr.mxu0 0.0
          %655 = vmatpush1.msra.mxu0 %v603
          %656 = vmatprep.subr.mxu0 0.0
          %657 = vmatpush1.msra.mxu0 %v604
          %658 = vmatprep.subr.mxu0 0.0
          %659 = vmatpush1.msra.mxu0 %v605
          %660 = vmatprep.subr.mxu0 0.0
          %661 = vmatpush1.msra.mxu0 %v606
          %662 = vmatprep.subr.mxu0 0.0
          %663 = vmatpush1.msra.mxu0 %v607
          %664 = vmatprep.subr.mxu0 0.0
          %665 = vmatpush1.msra.mxu0 %v608
          %666 = vmatprep.subr.mxu0 0.0
          %667 = vmatpush1.msra.mxu0 %v609
          %668 = vmatprep.subr.mxu0 0.0
          %669 = vmatpush1.msra.mxu0 %v610
          %670 = vmatprep.subr.mxu0 0.0
          %671 = vmatpush1.msra.mxu0 %v611
          %672 = vmatprep.subr.mxu0 0.0
          %673 = vmatpush1.msra.mxu0 %v612
          %674 = vmatprep.subr.mxu0 0.0
          %675 = vmatpush1.msra.mxu0 %v613
          %676 = vmatprep.subr.mxu0 0.0
          %677 = vmatpush1.msra.mxu0 %v614
          %678 = vmatprep.subr.mxu0 0.0
          %679 = vmatpush1.msra.mxu0 %v615
          %680 = vmatprep.subr.mxu0 0.0
          %681 = vmatpush1.msra.mxu0 %v616
          %682 = vmatprep.subr.mxu0 0.0
          %683 = vmatpush1.msra.mxu0 %v617
          %684 = vmatprep.subr.mxu0 0.0
          %685 = vmatpush1.msra.mxu0 %v618
          %686 = vmatprep.subr.mxu0 0.0
          %687 = vmatpush1.msra.mxu0 %v619
          %688 = vmatprep.subr.mxu0 0.0
          %689 = vmatpush1.msra.mxu0 %v620
          %690 = vmatprep.subr.mxu0 0.0
          %691 = vmatpush1.msra.mxu0 %v621
          %692 = vmatprep.subr.mxu0 0.0
          %693 = vmatpush1.msra.mxu0 %v622
          %694 = vmatprep.mubr.f32.mxu0 %v590
          %695 = vmatmul.mubr.f32.gmra.mrb[0].mxu0 %v589
          %v696 = vpop.f32.mrb[0].mxu0
          %v697 = vadd.f32 %v628, %v696
          %v698 = vpop.f32.mrb[0].mxu0
          %699 = vdwg.mxu0
          %700 = vst [vmem:[#allocation11] sm:$0x3] %v697
        $region76: #{tpu_custom_call.1} parent=51 // pred_fallthru
          _
        // Predicated region
        $region77: #{tpu_custom_call.1} parent=51 // pred_check
          %p701 = pneg %p230
        $region78: #{tpu_custom_call.1} parent=51 // pred_check_branch
          %703 = sbr.rel (%p701) target = $region80
        $region79: #{tpu_custom_call.1} parent=51 // pred_region
          %s705 = ssub.s32 32, 32
          %706 = vsyncadd [#allocation5], %s705
          %s707 = smul.addr %s29, 32
          %s708 = scalar_lea.hbm %s8, %s707
          %s710 = sshll.u32 [#allocation11], 4
          %s711 = int_to_ptr.vmem [resolvable:$true] %s710
          %713 = dma.vmem_to_hbm [thread:$0]  %s711, 32, %s708, [#allocation5]
        $region80: #{tpu_custom_call.1} parent=51 // pred_fallthru
          _
        // Predicated region
        $region81: #{tpu_custom_call.1} parent=51 // pred_check
          %p714 = pneg %p230
        $region82: #{tpu_custom_call.1} parent=51 // pred_check_branch
          %716 = sbr.rel (%p714) target = $region84
        $region83: #{tpu_custom_call.1} parent=51 // pred_region
          %717 = dma.done [#allocation5], 32
        $region84: #{tpu_custom_call.1} parent=51 // pred_fallthru
          _
      $region52: #{tpu_custom_call.1} parent=5 // pred_fallthru
        _
      %p718 = scmp.le.s32.totalorder 2, %s20
      // Predicated region
      $region85: #{tpu_custom_call.1} parent=5 // pred_check
        %p719 = pneg %p718
      $region86: #{tpu_custom_call.1} parent=5 // pred_check_branch
        %721 = sbr.rel (%p719) target = $region88
      $region87: #{tpu_custom_call.1} parent=5 // pred_region
        %s722 = ssub.s32 %s20, 2
      $region88: #{tpu_custom_call.1} parent=5 // pred_fallthru
        _
    $region6: #{tpu_custom_call.1} parent=1 // loop_footer
      %s24 = sadd.s32 1, %s20
    $region7: #{tpu_custom_call.1} parent=1 // loop_footer_branch
      %19 = sbr.rel target = $region3
    $region8: #{tpu_custom_call.1} parent=1 // loop_exit
      _
    %723 = vsyncpa [#allocation4], 1
    %s724 = scalar_lea.sflag [#allocation4], 1
    %725 = vsyncpa %s724, 1
    %726 = vsyncpa [#allocation7], 1
    %727 = vsyncpa [#allocation10], 1
    %728 = vsyncpa [#allocation5], 1
    %s729 = scalar_lea.sflag [#allocation5], 1
    %730 = vsyncpa %s729, 1

</llo_original>
